<compile_context>
chip_gen: v6e
topology: v6e:2x2x1
jax: 0.10.0
libtpu: 0.0.40
codegen_flags: <defaults>
</compile_context>

<pallas_src>
import functools

import jax
import jax.numpy as jnp
from jax.experimental import pallas as pl
from jax.experimental.pallas import tpu as pltpu


_VMEM_LIMIT_BYTES = 32 * 1024 * 1024     # explicit scoped-VMEM limit (safe on v5e/v6e/v7x)
_TILE_VMEM_BUDGET = 16 * 1024 * 1024     # budget used to size the batch tile
_MAX_TILE_N = 1024                       # diminishing returns past ~512-1024 rows


def _choose_tile_n(n, c, itemsize):
    """Largest multiple-of-8 row tile that fits the VMEM budget."""
    # Per row: x double-buffered in native dtype + ~6 live f32 C-wide temporaries
    # (x_f32, shifted, exp, iota/one-hot, products) + tiny int32 target column.
    per_row = 2 * c * itemsize + 6 * c * 4 + 2 * 4
    tile = _TILE_VMEM_BUDGET // max(per_row, 1)
    tile = min(int(tile), _MAX_TILE_N, max(int(n), 8))
    return max(8, (tile // 8) * 8)


# -------------------------------- kernel ------------------------------------
def _focal_kl_kernel(x_ref, y_ref, out_ref, *, alpha, gamma, n_valid, tile_n):
    x = x_ref[...].astype(jnp.float32)      # cast AFTER the DMA (native dtype in HBM)
    y = y_ref[...]                          # (tile_n, 1) int32
    tn, c = x.shape

    # Numerically stable log-softmax pieces (per row).
    m = jnp.max(x, axis=-1, keepdims=True)
    z = x - m
    lse = jnp.log(jnp.sum(jnp.exp(z), axis=-1, keepdims=True))       # (tn, 1)

    # One-hot gather of the target logit -> per-row cross entropy.
    class_ids = jax.lax.broadcasted_iota(jnp.int32, (tn, c), 1)
    onehot = (class_ids == y).astype(jnp.float32)                    # (tn, c)
    z_t = jnp.sum(onehot * z, axis=-1, keepdims=True)                # (tn, 1)
    ce = lse - z_t                                                   # -log p_target >= 0

    # Focal modulation: alpha * (1 - pt)^gamma * ce, pt = exp(-ce).
    pt = jnp.exp(-ce)
    one_minus_pt = jnp.maximum(1.0 - pt, 0.0)                        # guard fp rounding
    g = float(gamma)
    if g == int(g):
        mod = one_minus_pt ** int(g)        # lax.integer_pow -> plain multiplies (VPU)
    else:
        mod = jnp.exp(g * jnp.log(jnp.maximum(one_minus_pt, 1e-30)))
        mod = jnp.where(one_minus_pt > 0.0, mod, 0.0)
    focal = alpha * mod * ce

    # Mask padded tail rows (only emitted when N % tile_n != 0 -- static decision).
    if n_valid % tile_n != 0:
        row = (pl.program_id(0) * tile_n
               + jax.lax.broadcasted_iota(jnp.int32, (tn, 1), 0))
        valid = (row < n_valid).astype(jnp.float32)
        focal = focal * valid
        ce = ce * valid

    fsum = jnp.sum(focal, keepdims=True)    # (1, 1) per-tile focal partial
    ksum = jnp.sum(ce, keepdims=True)       # (1, 1) per-tile CE partial (for KL term)

    # Lane-dense (8, 128) partial-sum slab: [0,0] = focal partial, [0,1] = CE partial.
    sub = jax.lax.broadcasted_iota(jnp.int32, (8, 128), 0)
    lane = jax.lax.broadcasted_iota(jnp.int32, (8, 128), 1)
    slab = (jnp.where((sub == 0) & (lane == 0), fsum, 0.0)
            + jnp.where((sub == 0) & (lane == 1), ksum, 0.0))
    out_ref[...] = slab


@functools.partial(jax.jit, static_argnames=("alpha", "gamma"))
def _focal_kl_sums(x, y, *, alpha, gamma):
    """Returns (sum_i focal_i, sum_i ce_i) over the batch."""
    n, c = x.shape
    y = y.astype(jnp.int32)
    tile_n = _choose_tile_n(n, c, x.dtype.itemsize)
    n_pad = -(-n // tile_n) * tile_n
    if n_pad != n:
        x = jnp.pad(x, ((0, n_pad - n), (0, 0)))
        y = jnp.pad(y, ((0, n_pad - n),))
    y2 = y.reshape(n_pad, 1)
    num_tiles = n_pad // tile_n

    kernel = functools.partial(
        _focal_kl_kernel,
        alpha=float(alpha), gamma=float(gamma), n_valid=n, tile_n=tile_n)

    grid_spec = pltpu.PrefetchScalarGridSpec(
        num_scalar_prefetch=0,
        grid=(num_tiles,),
        in_specs=[
            pl.BlockSpec((tile_n, c), lambda i: (i, 0)),   # logits (native dtype)
            pl.BlockSpec((tile_n, 1), lambda i: (i, 0)),   # targets
        ],
        out_specs=pl.BlockSpec((8, 128), lambda i: (i, 0)),
    )

    partials = pl.pallas_call(
        kernel,
        out_shape=jax.ShapeDtypeStruct((num_tiles * 8, 128), jnp.float32),
        grid_spec=grid_spec,
        compiler_params=pltpu.CompilerParams(
            dimension_semantics=("parallel",),          # no cross-step carry -> megacore-ok
            vmem_limit_bytes=_VMEM_LIMIT_BYTES),
    )(x, y2)

    focal_sum = jnp.sum(partials[:, 0])
    ce_sum = jnp.sum(partials[:, 1])
    return focal_sum, ce_sum


# ------------------------------- module port ---------------------------------
class FocalKLLossPallas:
    """JAX/Pallas port of FocalKLLoss (forward only)."""

    def __init__(self, alpha=1.0, gamma=2.0, kl_lambda=0.9, reduction="mean"):
        if reduction not in ("mean", "sum"):
            # TODO(synk): reduction='none' needs a per-sample output block; only the
            # scalar reductions ('mean'/'sum', default 'mean') are implemented.
            raise NotImplementedError("reduction must be 'mean' or 'sum'")
        self.alpha = float(alpha)
        self.gamma = float(gamma)
        self.kl_lambda = float(kl_lambda)
        self.reduction = reduction

    def __call__(self, outputs, targets):
        n = outputs.shape[0]
        focal_sum, ce_sum = _focal_kl_sums(
            outputs, targets, alpha=self.alpha, gamma=self.gamma)
        f_loss = focal_sum / n if self.reduction == "mean" else focal_sum
        # F.kl_div(log softmax(x), one_hot(y), 'batchmean') == sum_i CE_i / N
        kl_loss = ce_sum / n
        return self.kl_lambda * f_loss + (1.0 - self.kl_lambda) * kl_loss


# --------------------------- pure-JAX reference ------------------------------
def _ref_forward(x, y, alpha, gamma, kl_lambda, reduction="mean"):
    x = x.astype(jnp.float32)
    logp = jax.nn.log_softmax(x, axis=-1)
    ce = -jnp.take_along_axis(logp, y[:, None], axis=-1)[:, 0]
    pt = jnp.exp(-ce)
    floss = alpha * (1.0 - pt) ** gamma * ce
    f = floss.mean() if reduction == "mean" else floss.sum()
    # kl_div(probs.log(), one_hot, 'batchmean'): only the target entries survive.
    kl = ce.sum() / x.shape[0]
    return kl_lambda * f + (1.0 - kl_lambda) * kl


# ---------------------------------- main -------------------------------------
if __name__ == "__main__":
    N, C = 50, 10    # non-multiple-of-8 batch exercises the padded/masked tail path

    key = jax.random.PRNGKey(0)
    kx, ky = jax.random.split(key)
    x = jax.random.normal(kx, (N, C), dtype=jnp.float32)
    y = jax.random.randint(ky, (N,), 0, C, dtype=jnp.int32)

    # default config (alpha=1, gamma=2, kl_lambda=0.9, mean reduction)
    loss_mod = FocalKLLossPallas(alpha=1.0, gamma=2.0, kl_lambda=0.9, reduction="mean")
    loss = jax.block_until_ready(loss_mod(x, y))
    ref = _ref_forward(x, y, 1.0, 2.0, 0.9, "mean")
    assert jnp.allclose(loss, ref, atol=1e-5, rtol=1e-5), (loss, ref)

    # alternate hyperparameters + 'sum' reduction
    loss_mod2 = FocalKLLossPallas(alpha=0.75, gamma=3.0, kl_lambda=0.5, reduction="sum")
    loss2 = jax.block_until_ready(loss_mod2(x, y))
    ref2 = _ref_forward(x, y, 0.75, 3.0, 0.5, "sum")
    assert jnp.allclose(loss2, ref2, atol=1e-4, rtol=1e-4), (loss2, ref2)

    # bf16 logits: DMA'd at half the bytes, cast to f32 inside the kernel
    x_bf16 = x.astype(jnp.bfloat16)
    loss_bf16 = jax.block_until_ready(loss_mod(x_bf16, y))
    ref_bf16 = _ref_forward(x_bf16.astype(jnp.float32), y, 1.0, 2.0, 0.9, "mean")
    assert jnp.allclose(loss_bf16, ref_bf16, atol=1e-4, rtol=1e-4), (loss_bf16, ref_bf16)

    print("KERNEL_OK")
</pallas_src>

<mosaic_0001>
module attributes {stable_mosaic.version = 11 : i64} {
  func.func @_focal_kl_kernel(%arg0: i32, %arg1: memref<48x10xf32, #tpu.memory_space<vmem>>, %arg2: memref<48x1xi32, #tpu.memory_space<vmem>>, %arg3: memref<8x128xf32, #tpu.memory_space<vmem>>) attributes {dimension_semantics = [#tpu.dimension_semantics<parallel>], iteration_bounds = array<i64: 2>, scalar_prefetch = 0 : i64, scratch_operands = 0 : i64, tpu.core_type = #tpu.core_type<tc>, window_params = [{transform_indices = @transform_0, window_bounds = array<i64: 48, 10>}, {transform_indices = @transform_1, window_bounds = array<i64: 48, 1>}, {transform_indices = @transform_2, window_bounds = array<i64: 8, 128>}]} {
    %c0 = arith.constant 0 : index
    %c0_0 = arith.constant 0 : index
    %0 = vector.load %arg1[%c0, %c0_0] : memref<48x10xf32, #tpu.memory_space<vmem>>, vector<48x10xf32>
    %c0_1 = arith.constant 0 : index
    %c0_2 = arith.constant 0 : index
    %1 = vector.load %arg2[%c0_1, %c0_2] : memref<48x1xi32, #tpu.memory_space<vmem>>, vector<48x1xi32>
    %cst = arith.constant dense<0xFF800000> : vector<48xf32>
    %2 = vector.multi_reduction <maximumf>, %0, %cst [1] : vector<48x10xf32> to vector<48xf32>
    %3 = vector.shape_cast %2 : vector<48xf32> to vector<48x1xf32>
    %4 = vector.broadcast %3 : vector<48x1xf32> to vector<48x10xf32>
    %5 = arith.subf %0, %4 : vector<48x10xf32>
    %6 = math.exp %5 : vector<48x10xf32>
    %cst_3 = arith.constant dense<0.000000e+00> : vector<48xf32>
    %7 = vector.multi_reduction <add>, %6, %cst_3 [1] : vector<48x10xf32> to vector<48xf32>
    %8 = vector.shape_cast %7 : vector<48xf32> to vector<48x1xf32>
    %9 = math.log %8 : vector<48x1xf32>
    %10 = tpu.iota {dimensions = array<i32: 1>} : vector<48x10xi32>
    %11 = vector.broadcast %1 : vector<48x1xi32> to vector<48x10xi32>
    %12 = arith.cmpi eq, %10, %11 : vector<48x10xi32>
    %13 = arith.extui %12 : vector<48x10xi1> to vector<48x10xi32>
    %14 = arith.sitofp %13 : vector<48x10xi32> to vector<48x10xf32>
    %15 = arith.mulf %14, %5 : vector<48x10xf32>
    %cst_4 = arith.constant dense<0.000000e+00> : vector<48xf32>
    %16 = vector.multi_reduction <add>, %15, %cst_4 [1] : vector<48x10xf32> to vector<48xf32>
    %17 = vector.shape_cast %16 : vector<48xf32> to vector<48x1xf32>
    %18 = arith.subf %9, %17 : vector<48x1xf32>
    %cst_5 = arith.constant 0.000000e+00 : f32
    %19 = vector.broadcast %cst_5 : f32 to vector<48x1xf32>
    %20 = arith.subf %19, %18 : vector<48x1xf32>
    %21 = math.exp %20 : vector<48x1xf32>
    %cst_6 = arith.constant 1.000000e+00 : f32
    %22 = vector.broadcast %cst_6 : f32 to vector<48x1xf32>
    %23 = arith.subf %22, %21 : vector<48x1xf32>
    %cst_7 = arith.constant 0.000000e+00 : f32
    %24 = vector.broadcast %cst_7 : f32 to vector<48x1xf32>
    %25 = arith.maximumf %23, %24 : vector<48x1xf32>
    %26 = arith.mulf %25, %25 : vector<48x1xf32>
    %cst_8 = arith.constant 1.000000e+00 : f32
    %27 = vector.broadcast %cst_8 : f32 to vector<48x1xf32>
    %28 = arith.mulf %27, %26 : vector<48x1xf32>
    %29 = arith.mulf %28, %18 : vector<48x1xf32>
    %c48_i32 = arith.constant 48 : i32
    %30 = arith.muli %arg0, %c48_i32 : i32
    %31 = tpu.iota {dimensions = array<i32: 0>} : vector<48x1xi32>
    %32 = vector.broadcast %30 : i32 to vector<48x1xi32>
    %33 = arith.addi %32, %31 : vector<48x1xi32>
    %c50_i32 = arith.constant 50 : i32
    %34 = vector.broadcast %c50_i32 : i32 to vector<48x1xi32>
    %35 = arith.cmpi slt, %33, %34 : vector<48x1xi32>
    %36 = arith.extui %35 : vector<48x1xi1> to vector<48x1xi32>
    %37 = arith.sitofp %36 : vector<48x1xi32> to vector<48x1xf32>
    %38 = arith.mulf %29, %37 : vector<48x1xf32>
    %39 = arith.mulf %18, %37 : vector<48x1xf32>
    %40 = vector.shape_cast %38 : vector<48x1xf32> to vector<1x48x1xf32>
    %cst_9 = arith.constant dense<0.000000e+00> : vector<1xf32>
    %41 = vector.multi_reduction <add>, %40, %cst_9 [1, 2] : vector<1x48x1xf32> to vector<1xf32>
    %42 = vector.shape_cast %41 : vector<1xf32> to vector<1x1x1xf32>
    %43 = vector.extract %42[0, 0, 0] : f32 from vector<1x1x1xf32>
    %44 = vector.broadcast %43 : f32 to vector<1x1xf32>
    %45 = vector.shape_cast %39 : vector<48x1xf32> to vector<1x48x1xf32>
    %cst_10 = arith.constant dense<0.000000e+00> : vector<1xf32>
    %46 = vector.multi_reduction <add>, %45, %cst_10 [1, 2] : vector<1x48x1xf32> to vector<1xf32>
    %47 = vector.shape_cast %46 : vector<1xf32> to vector<1x1x1xf32>
    %48 = vector.extract %47[0, 0, 0] : f32 from vector<1x1x1xf32>
    %49 = vector.broadcast %48 : f32 to vector<1x1xf32>
    %50 = tpu.iota {dimensions = array<i32: 0>} : vector<8x128xi32>
    %51 = tpu.iota {dimensions = array<i32: 1>} : vector<8x128xi32>
    %c0_i32 = arith.constant 0 : i32
    %52 = vector.broadcast %c0_i32 : i32 to vector<8x128xi32>
    %53 = arith.cmpi eq, %50, %52 : vector<8x128xi32>
    %c0_i32_11 = arith.constant 0 : i32
    %54 = vector.broadcast %c0_i32_11 : i32 to vector<8x128xi32>
    %55 = arith.cmpi eq, %51, %54 : vector<8x128xi32>
    %56 = arith.andi %53, %55 : vector<8x128xi1>
    %cst_12 = arith.constant 0.000000e+00 : f32
    %57 = vector.shape_cast %44 : vector<1x1xf32> to vector<1x1xf32>
    %58 = vector.broadcast %57 : vector<1x1xf32> to vector<8x128xf32>
    %59 = vector.broadcast %cst_12 : f32 to vector<8x128xf32>
    %60 = arith.select %56, %58, %59 : vector<8x128xi1>, vector<8x128xf32>
    %c0_i32_13 = arith.constant 0 : i32
    %61 = vector.broadcast %c0_i32_13 : i32 to vector<8x128xi32>
    %62 = arith.cmpi eq, %50, %61 : vector<8x128xi32>
    %c1_i32 = arith.constant 1 : i32
    %63 = vector.broadcast %c1_i32 : i32 to vector<8x128xi32>
    %64 = arith.cmpi eq, %51, %63 : vector<8x128xi32>
    %65 = arith.andi %62, %64 : vector<8x128xi1>
    %cst_14 = arith.constant 0.000000e+00 : f32
    %66 = vector.shape_cast %49 : vector<1x1xf32> to vector<1x1xf32>
    %67 = vector.broadcast %66 : vector<1x1xf32> to vector<8x128xf32>
    %68 = vector.broadcast %cst_14 : f32 to vector<8x128xf32>
    %69 = arith.select %65, %67, %68 : vector<8x128xi1>, vector<8x128xf32>
    %70 = arith.addf %60, %69 : vector<8x128xf32>
    %c0_15 = arith.constant 0 : index
    %c0_16 = arith.constant 0 : index
    %71 = vector.load %arg3[%c0_15, %c0_16] : memref<8x128xf32, #tpu.memory_space<vmem>>, vector<8x128xf32>
    tpu.vector_store %arg3[%c0_15, %c0_16], %70 {strides = array<i32>} : memref<8x128xf32, #tpu.memory_space<vmem>>, vector<8x128xf32>,
    return
  }
  func.func @transform_0(%arg0: i32) -> (i32, i32) {
    %c0_i32 = arith.constant 0 : i32
    %c0_i32_0 = arith.constant 0 : i32
    return %arg0, %c0_i32 : i32, i32
  }
  func.func @transform_1(%arg0: i32) -> (i32, i32) {
    %c0_i32 = arith.constant 0 : i32
    %c0_i32_0 = arith.constant 0 : i32
    return %arg0, %c0_i32 : i32, i32
  }
  func.func @transform_2(%arg0: i32) -> (i32, i32) {
    %c0_i32 = arith.constant 0 : i32
    %c0_i32_0 = arith.constant 0 : i32
    return %arg0, %c0_i32 : i32, i32
  }
}

</mosaic_0001>

<llo_original>
// kernel: _focal_kl_sums.1
$region0: #{_focal_kl_sums.1}
  #allocation0 [shape = 'u32[]', space=smem, size = 0x4, offset = 0x4, fixed_abs, tag = 'smem constant byte address 0x4 - core index']
  #allocation1 [shape = 'u32[144,128]{1,0:T(1,128)}', space=vmem, size = 0x12000, scoped, tag = 'internal scratch']
  %s0 = inlined_call_operand.vmem [shape: f32[96,10], index: 0, kind: input, shape index: {}]
  %s1 = inlined_call_operand.vmem [shape: s32[96,1], index: 1, kind: input, shape index: {}]
  %s2 = inlined_call_operand.vmem [shape: f32[16,128], index: 2, kind: output, shape index: {}]
  %s3 = sld [smem:[#allocation0]]
  $region41: #{_focal_kl_sums.1} parent=0
    _
  %s5 = ssub.s32 1, %s3
  %s6 = scalar_select 0, %s5, %s3
  loop: start=0, step=1, limit=4
  $region2: #{_focal_kl_sums.1} parent=0 // loop_pre_header
    _
  $region3: #{_focal_kl_sums.1} parent=0 // loop_header
    %s8 = sphi 0, %s12
    %p9 = scmp.ge.s32.totalorder %s8, 4
    %s18 = sphi 0, %s20
    %s21 = sphi 0, %s18
    %s22 = sphi 0, %s21
    %s38 = sphi 0, %s22
    %s44 = sphi 0, %s46
    %s47 = sphi 0, %s44
    %s48 = sphi 0, %s47
    %s64 = sphi 0, %s48
    %s70 = sphi 0, %s72
    %s73 = sphi 0, %s70
    %s74 = sphi 0, %s73
    %s90 = sphi 0, %s74
  $region4: #{_focal_kl_sums.1} parent=0 // loop_header_branch
    %11 = sbr.rel (%p9) target = $region8
  $region5: #{_focal_kl_sums.1} parent=0 // loop_body
    %s13 = ssub.s32 %s8, 1
    %s14 = ssub.s32 %s8, 2
    %s15 = sadd.s32 %s8, 1
    %s16 = ssub.s32 %s8, %s15
    %p17 = scmp.eq.s32.totalorder %s16, 0
    %s19 = sadd.s32 %s18, 1
    %s20 = scalar_select %p17, %s18, %s19
    %p23 = pneg %p17
    %p24 = scmp.eq.s32.totalorder %s8, 1
    %p25 = por %p23, %p24
    %p26 = scmp.ne.s32.totalorder %s18, %s21
    %p27 = scmp.eq.s32.totalorder %s8, 0
    %p28 = por %p26, %p27
    %p29 = scmp.ne.s32.totalorder %s18, %s21
    %p30 = scmp.eq.s32.totalorder %s13, 1
    %p31 = por %p29, %p30
    %p32 = scmp.ne.s32.totalorder %s21, %s22
    %p33 = scmp.eq.s32.totalorder %s13, 0
    %p34 = por %p32, %p33
    %p35 = scmp.ne.s32.totalorder %s21, %s22
    %p36 = scmp.eq.s32.totalorder %s14, 1
    %p37 = por %p35, %p36
    %p39 = scmp.ne.s32.totalorder %s22, %s38
    %p40 = scmp.eq.s32.totalorder %s14, 0
    %p41 = por %p39, %p40
    %s42 = ssub.s32 %s8, %s15
    %p43 = scmp.eq.s32.totalorder %s42, 0
    %s45 = sadd.s32 %s44, 1
    %s46 = scalar_select %p43, %s44, %s45
    %p49 = pneg %p43
    %p50 = scmp.eq.s32.totalorder %s8, 1
    %p51 = por %p49, %p50
    %p52 = scmp.ne.s32.totalorder %s44, %s47
    %p53 = scmp.eq.s32.totalorder %s8, 0
    %p54 = por %p52, %p53
    %p55 = scmp.ne.s32.totalorder %s44, %s47
    %p56 = scmp.eq.s32.totalorder %s13, 1
    %p57 = por %p55, %p56
    %p58 = scmp.ne.s32.totalorder %s47, %s48
    %p59 = scmp.eq.s32.totalorder %s13, 0
    %p60 = por %p58, %p59
    %p61 = scmp.ne.s32.totalorder %s47, %s48
    %p62 = scmp.eq.s32.totalorder %s14, 1
    %p63 = por %p61, %p62
    %p65 = scmp.ne.s32.totalorder %s48, %s64
    %p66 = scmp.eq.s32.totalorder %s14, 0
    %p67 = por %p65, %p66
    %s68 = ssub.s32 %s8, %s15
    %p69 = scmp.eq.s32.totalorder %s68, 0
    %s71 = sadd.s32 %s70, 1
    %s72 = scalar_select %p69, %s70, %s71
    %p75 = pneg %p69
    %p76 = scmp.eq.s32.totalorder %s8, 1
    %p77 = por %p75, %p76
    %p78 = scmp.ne.s32.totalorder %s70, %s73
    %p79 = scmp.eq.s32.totalorder %s8, 0
    %p80 = por %p78, %p79
    %p81 = scmp.ne.s32.totalorder %s70, %s73
    %p82 = scmp.eq.s32.totalorder %s13, 1
    %p83 = por %p81, %p82
    %p84 = scmp.ne.s32.totalorder %s73, %s74
    %p85 = scmp.eq.s32.totalorder %s13, 0
    %p86 = por %p84, %p85
    %p87 = scmp.ne.s32.totalorder %s73, %s74
    %p88 = scmp.eq.s32.totalorder %s14, 1
    %p89 = por %p87, %p88
    %p91 = scmp.ne.s32.totalorder %s74, %s90
    %p92 = scmp.eq.s32.totalorder %s14, 0
    %p93 = por %p91, %p92
    %p94 = scmp.le.s32.totalorder 1, %s8
    %p95 = scmp.lt.s32.totalorder %s8, 3
    %p96 = pnand %p94, %p95
    %p97 = pneg %p96
    // Predicated region
    $region9: #{_focal_kl_sums.1} parent=5 // pred_check
      _
    $region10: #{_focal_kl_sums.1} parent=5 // pred_check_branch
      %99 = sbr.rel (%p96) target = $region12
    $region11: #{_focal_kl_sums.1} parent=5 // pred_region
      %s100 = ssub.s32 %s8, 1
    $region12: #{_focal_kl_sums.1} parent=5 // pred_fallthru
      _
    %p101 = scmp.lt.s32.totalorder %s8, 2
    // Predicated region
    $region13: #{_focal_kl_sums.1} parent=5 // pred_check
      %p102 = pneg %p101
    $region14: #{_focal_kl_sums.1} parent=5 // pred_check_branch
      %104 = sbr.rel (%p102) target = $region16
    $region15: #{_focal_kl_sums.1} parent=5 // pred_region
      // Predicated region
      $region17: #{_focal_kl_sums.1} parent=15 // pred_check
        %p105 = pneg %p28
      $region18: #{_focal_kl_sums.1} parent=15 // pred_check_branch
        %107 = sbr.rel (%p105) target = $region20
      $region19: #{_focal_kl_sums.1} parent=15 // pred_region
        %s108 = smul.u32 6, %s8
        %p109 = scmp.lt.s32.totalorder %s108, 11
        %s110 = scalar_select %p109, %s108, 11
        %s111 = smul.addr %s110, 8
        %s112 = scalar_lea.vmem %s0, %s111
        %s113 = smul.u32 6, %s8
      $region20: #{_focal_kl_sums.1} parent=15 // pred_fallthru
        _
      // Predicated region
      $region21: #{_focal_kl_sums.1} parent=15 // pred_check
        %p114 = pneg %p54
      $region22: #{_focal_kl_sums.1} parent=15 // pred_check_branch
        %116 = sbr.rel (%p114) target = $region24
      $region23: #{_focal_kl_sums.1} parent=15 // pred_region
        %s117 = smul.u32 6, %s8
        %p118 = scmp.lt.s32.totalorder %s117, 11
        %s119 = scalar_select %p118, %s117, 11
        %s120 = smul.addr %s119, 8
        %s121 = scalar_lea.vmem %s1, %s120
        %s122 = smul.u32 6, %s8
      $region24: #{_focal_kl_sums.1} parent=15 // pred_fallthru
        _
    $region16: #{_focal_kl_sums.1} parent=5 // pred_fallthru
      _
    %p123 = scmp.le.s32.totalorder 1, %s8
    %p124 = scmp.lt.s32.totalorder %s8, 3
    %p125 = pnand %p123, %p124
    %p126 = pneg %p125
    // Predicated region
    $region25: #{_focal_kl_sums.1} parent=5 // pred_check
      _
    $region26: #{_focal_kl_sums.1} parent=5 // pred_check_branch
      %128 = sbr.rel (%p125) target = $region28
    $region27: #{_focal_kl_sums.1} parent=5 // pred_region
      %s129 = ssub.s32 %s8, 1
      %s130 = smul.u32 6, %s13
      %p131 = scmp.lt.s32.totalorder %s130, 11
      %s132 = scalar_select %p131, %s130, 11
      %s133 = smul.addr %s132, 8
      %s134 = scalar_lea.vmem %s0, %s133
      %p135 = pneg %p34
      %p136 = pneg %p31
      %s137 = smul.u32 6, %s13
      %p138 = scmp.lt.s32.totalorder %s137, 11
      %s139 = scalar_select %p138, %s137, 11
      %s140 = smul.addr %s139, 8
      %s141 = scalar_lea.vmem %s1, %s140
      %p142 = pneg %p60
      %p143 = pneg %p57
      %p144 = pneg %p86
      %p145 = pneg %p83
      %p146 = scmp.lt.s32.totalorder %s13, 1
      %s147 = scalar_select %p146, %s13, 1
      %s148 = smul.addr %s147, 8
      %s149 = scalar_lea.vmem %s2, %s148
      %s150 = smul.u32 6, %s13
      %p151 = scmp.lt.s32.totalorder %s150, 11
      %s152 = scalar_select %p151, %s150, 11
      %s153 = smul.addr %s152, 8
      %s154 = scalar_lea.vmem %s0, %s153
      %s155 = smul.u32 6, %s13
      %s156 = smul.u32 6, %s13
      %p157 = scmp.lt.s32.totalorder %s156, 11
      %s158 = scalar_select %p157, %s156, 11
      %s159 = smul.addr %s158, 8
      %s160 = scalar_lea.vmem %s1, %s159
      %s161 = smul.u32 6, %s13
      %p162 = scmp.lt.s32.totalorder %s13, 1
      %s163 = scalar_select %p162, %s13, 1
      %s164 = smul.addr %s163, 8
      %s165 = scalar_lea.vmem %s2, %s164
      %v166 = vld [vmem:[%s154] sm:$0xff]
      %v167 = vld [vmem:[%s154 + $0x8] sm:$0xff]
      %v168 = vld [vmem:[%s154 + $0x10] sm:$0xff]
      %v169 = vld [vmem:[%s154 + $0x18] sm:$0xff]
      %v170 = vld [vmem:[%s154 + $0x20] sm:$0xff]
      %v171 = vld [vmem:[%s154 + $0x28] sm:$0xff]
      %v172 = vld [vmem:[%s160] sm:$0xff]
      %v173 = vld [vmem:[%s160 + $0x8] sm:$0xff]
      %v174 = vld [vmem:[%s160 + $0x10] sm:$0xff]
      %v175 = vld [vmem:[%s160 + $0x18] sm:$0xff]
      %v176 = vld [vmem:[%s160 + $0x20] sm:$0xff]
      %v177 = vld [vmem:[%s160 + $0x28] sm:$0xff]
      %vm178 = vcmask 80896
      %v179 = vsel %vm178, %v166, -inf
      %180 = vmax.xlane.f32.xlu0 %v179
      %v181 = vpop.xlane.xlu0 %180
      %v182 = vsel %vm178, %v167, -inf
      %183 = vmax.xlane.f32.xlu0 %v182
      %v184 = vpop.xlane.xlu0 %183
      %v185 = vsel %vm178, %v168, -inf
      %186 = vmax.xlane.f32.xlu0 %v185
      %v187 = vpop.xlane.xlu0 %186
      %v188 = vsel %vm178, %v169, -inf
      %189 = vmax.xlane.f32.xlu0 %v188
      %v190 = vpop.xlane.xlu0 %189
      %v191 = vsel %vm178, %v170, -inf
      %192 = vmax.xlane.f32.xlu0 %v191
      %v193 = vpop.xlane.xlu0 %192
      %v194 = vsel %vm178, %v171, -inf
      %195 = vmax.xlane.f32.xlu0 %v194
      %v196 = vpop.xlane.xlu0 %195
      %v197 = vsub.f32 %v166, %v181
      %v198 = vsub.f32 %v167, %v184
      %v199 = vsub.f32 %v168, %v187
      %v200 = vsub.f32 %v169, %v190
      %v201 = vsub.f32 %v170, %v193
      %v202 = vsub.f32 %v171, %v196
      %v203 = vmul.f32 %v197, 1.442695
      %v204 = vpow.pop %v203
      %v205 = vmul.f32 %v198, 1.442695
      %v206 = vpow.pop %v205
      %v207 = vmul.f32 %v199, 1.442695
      %v208 = vpow.pop %v207
      %v209 = vmul.f32 %v200, 1.442695
      %v210 = vpow.pop %v209
      %v211 = vmul.f32 %v201, 1.442695
      %v212 = vpow.pop %v211
      %v213 = vmul.f32 %v202, 1.442695
      %v214 = vpow.pop %v213
      %v215 = vsel %vm178, %v204, 0.0
      %216 = vadd.xlane.f32.xlu0 %v215
      %v217 = vpop.xlane.xlu0 %216
      %v218 = vsel %vm178, %v206, 0.0
      %219 = vadd.xlane.f32.xlu0 %v218
      %v220 = vpop.xlane.xlu0 %219
      %v221 = vsel %vm178, %v208, 0.0
      %222 = vadd.xlane.f32.xlu0 %v221
      %v223 = vpop.xlane.xlu0 %222
      %v224 = vsel %vm178, %v210, 0.0
      %225 = vadd.xlane.f32.xlu0 %v224
      %v226 = vpop.xlane.xlu0 %225
      %v227 = vsel %vm178, %v212, 0.0
      %228 = vadd.xlane.f32.xlu0 %v227
      %v229 = vpop.xlane.xlu0 %228
      %v230 = vsel %vm178, %v214, 0.0
      %231 = vadd.xlane.f32.xlu0 %v230
      %v232 = vpop.xlane.xlu0 %231
      %v233 = vlog2.pop %v217
      %v234 = vmul.f32 %v233, 0.6931472
      %v235 = vlog2.pop %v220
      %v236 = vmul.f32 %v235, 0.6931472
      %v237 = vlog2.pop %v223
      %v238 = vmul.f32 %v237, 0.6931472
      %v239 = vlog2.pop %v226
      %v240 = vmul.f32 %v239, 0.6931472
      %v241 = vlog2.pop %v229
      %v242 = vmul.f32 %v241, 0.6931472
      %v243 = vlog2.pop %v232
      %v244 = vmul.f32 %v243, 0.6931472
      %v245 = vlaneseq
      %v246 = vand.u32 %v245, 127
      %247 = vset.pattern.permute.xlu0 0
      %248 = vperm.xlu0 %247, %v172
      %v249 = vpop.permute.xlu0 %248
      %250 = vset.pattern.permute.xlu0 0
      %251 = vperm.xlu0 %250, %v173
      %v252 = vpop.permute.xlu0 %251
      %253 = vset.pattern.permute.xlu0 0
      %254 = vperm.xlu0 %253, %v174
      %v255 = vpop.permute.xlu0 %254
      %256 = vset.pattern.permute.xlu0 0
      %257 = vperm.xlu0 %256, %v175
      %v258 = vpop.permute.xlu0 %257
      %259 = vset.pattern.permute.xlu0 0
      %260 = vperm.xlu0 %259, %v176
      %v261 = vpop.permute.xlu0 %260
      %262 = vset.pattern.permute.xlu0 0
      %263 = vperm.xlu0 %262, %v177
      %v264 = vpop.permute.xlu0 %263
      %vm265 = vcmp.eq.s32.totalorder %v246, %v249
      %vm266 = vcmp.eq.s32.totalorder %v246, %v252
      %vm267 = vcmp.eq.s32.totalorder %v246, %v255
      %vm268 = vcmp.eq.s32.totalorder %v246, %v258
      %vm269 = vcmp.eq.s32.totalorder %v246, %v261
      %vm270 = vcmp.eq.s32.totalorder %v246, %v264
      %v271 = vsel %vm265, 1, 0
      %v272 = vsel %vm266, 1, 0
      %v273 = vsel %vm267, 1, 0
      %v274 = vsel %vm268, 1, 0
      %v275 = vsel %vm269, 1, 0
      %v276 = vsel %vm270, 1, 0
      %v277 = vcvt.s32.f32 %v271
      %v278 = vcvt.s32.f32 %v272
      %v279 = vcvt.s32.f32 %v273
      %v280 = vcvt.s32.f32 %v274
      %v281 = vcvt.s32.f32 %v275
      %v282 = vcvt.s32.f32 %v276
      %v283 = vmul.f32 %v277, %v197
      %v284 = vmul.f32 %v278, %v198
      %v285 = vmul.f32 %v279, %v199
      %v286 = vmul.f32 %v280, %v200
      %v287 = vmul.f32 %v281, %v201
      %v288 = vmul.f32 %v282, %v202
      %v289 = vsel %vm178, %v283, 0.0
      %290 = vadd.xlane.f32.xlu0 %v289
      %v291 = vpop.xlane.xlu0 %290
      %v292 = vsel %vm178, %v284, 0.0
      %293 = vadd.xlane.f32.xlu0 %v292
      %v294 = vpop.xlane.xlu0 %293
      %v295 = vsel %vm178, %v285, 0.0
      %296 = vadd.xlane.f32.xlu0 %v295
      %v297 = vpop.xlane.xlu0 %296
      %v298 = vsel %vm178, %v286, 0.0
      %299 = vadd.xlane.f32.xlu0 %v298
      %v300 = vpop.xlane.xlu0 %299
      %v301 = vsel %vm178, %v287, 0.0
      %302 = vadd.xlane.f32.xlu0 %v301
      %v303 = vpop.xlane.xlu0 %302
      %v304 = vsel %vm178, %v288, 0.0
      %305 = vadd.xlane.f32.xlu0 %v304
      %v306 = vpop.xlane.xlu0 %305
      %v307 = vsub.f32 %v234, %v291
      %v308 = vsub.f32 %v236, %v294
      %v309 = vsub.f32 %v238, %v297
      %v310 = vsub.f32 %v240, %v300
      %v311 = vsub.f32 %v242, %v303
      %v312 = vsub.f32 %v244, %v306
      %v313 = vsub.f32 0.0, %v307
      %v314 = vsub.f32 0.0, %v308
      %v315 = vsub.f32 0.0, %v309
      %v316 = vsub.f32 0.0, %v310
      %v317 = vsub.f32 0.0, %v311
      %v318 = vsub.f32 0.0, %v312
      %v319 = vmul.f32 %v313, 1.442695
      %v320 = vpow.pop %v319
      %v321 = vmul.f32 %v314, 1.442695
      %v322 = vpow.pop %v321
      %v323 = vmul.f32 %v315, 1.442695
      %v324 = vpow.pop %v323
      %v325 = vmul.f32 %v316, 1.442695
      %v326 = vpow.pop %v325
      %v327 = vmul.f32 %v317, 1.442695
      %v328 = vpow.pop %v327
      %v329 = vmul.f32 %v318, 1.442695
      %v330 = vpow.pop %v329
      %v331 = vsub.f32 1.0, %v320
      %v332 = vsub.f32 1.0, %v322
      %v333 = vsub.f32 1.0, %v324
      %v334 = vsub.f32 1.0, %v326
      %v335 = vsub.f32 1.0, %v328
      %v336 = vsub.f32 1.0, %v330
      %v337 = vmax.f32 %v331, 0.0
      %v338 = vmax.f32 %v332, 0.0
      %v339 = vmax.f32 %v333, 0.0
      %v340 = vmax.f32 %v334, 0.0
      %v341 = vmax.f32 %v335, 0.0
      %v342 = vmax.f32 %v336, 0.0
      %v343 = vmul.f32 %v337, %v337
      %v344 = vmul.f32 %v338, %v338
      %v345 = vmul.f32 %v339, %v339
      %v346 = vmul.f32 %v340, %v340
      %v347 = vmul.f32 %v341, %v341
      %v348 = vmul.f32 %v342, %v342
      %v349 = vmul.f32 %v343, %v307
      %v350 = vmul.f32 %v344, %v308
      %v351 = vmul.f32 %v345, %v309
      %v352 = vmul.f32 %v346, %v310
      %v353 = vmul.f32 %v347, %v311
      %v354 = vmul.f32 %v348, %v312
      %s355 = smul.u32 %s13, 48
      %v356 = vlaneseq
      %v357 = vshrl.u32 %v356, 7
      %v358 = vadd.s32 %v357, 8
      %v359 = vadd.s32 %v357, 16
      %v360 = vadd.s32 %v357, 24
      %v361 = vadd.s32 %v357, 32
      %v362 = vadd.s32 %v357, 40
      %v363 = vstv %s355
      %v364 = vadd.s32 %v363, %v357
      %v365 = vadd.s32 %v363, %v358
      %v366 = vadd.s32 %v363, %v359
      %v367 = vadd.s32 %v363, %v360
      %v368 = vadd.s32 %v363, %v361
      %v369 = vadd.s32 %v363, %v362
      %vm370 = vcmp.lt.s32.totalorder %v364, 50
      %vm371 = vcmp.lt.s32.totalorder %v365, 50
      %vm372 = vcmp.lt.s32.totalorder %v366, 50
      %vm373 = vcmp.lt.s32.totalorder %v367, 50
      %vm374 = vcmp.lt.s32.totalorder %v368, 50
      %vm375 = vcmp.lt.s32.totalorder %v369, 50
      %v376 = vsel %vm370, 1, 0
      %v377 = vsel %vm371, 1, 0
      %v378 = vsel %vm372, 1, 0
      %v379 = vsel %vm373, 1, 0
      %v380 = vsel %vm374, 1, 0
      %v381 = vsel %vm375, 1, 0
      %v382 = vcvt.s32.f32 %v376
      %v383 = vcvt.s32.f32 %v377
      %v384 = vcvt.s32.f32 %v378
      %v385 = vcvt.s32.f32 %v379
      %v386 = vcvt.s32.f32 %v380
      %v387 = vcvt.s32.f32 %v381
      %v388 = vmul.f32 %v349, %v382
      %v389 = vmul.f32 %v350, %v383
      %v390 = vmul.f32 %v351, %v384
      %v391 = vmul.f32 %v352, %v385
      %v392 = vmul.f32 %v353, %v386
      %v393 = vmul.f32 %v354, %v387
      %v394 = vmul.f32 %v307, %v382
      %v395 = vmul.f32 %v308, %v383
      %v396 = vmul.f32 %v309, %v384
      %v397 = vmul.f32 %v310, %v385
      %v398 = vmul.f32 %v311, %v386
      %v399 = vmul.f32 %v312, %v387
      %vm400 = vcmask 7168
      %v401 = vsel %vm400, %v388, 0.0
      %v402 = vsel %vm400, %v389, 0.0
      %v403 = vadd.f32 %v401, %v402
      %v404 = vsel %vm400, %v390, 0.0
      %v405 = vadd.f32 %v403, %v404
      %v406 = vsel %vm400, %v391, 0.0
      %v407 = vadd.f32 %v405, %v406
      %v408 = vsel %vm400, %v392, 0.0
      %v409 = vadd.f32 %v407, %v408
      %v410 = vsel %vm400, %v393, 0.0
      %v411 = vadd.f32 %v409, %v410
      %412 = vadd.xlane.f32.xlu0 %v411
      %v413 = vpop.xlane.xlu0 %412
      %v414 = vrot.slane %v413, 4
      %v415 = vadd.f32 %v413, %v414
      %v416 = vrot.slane %v415, 2
      %v417 = vadd.f32 %v415, %v416
      %v418 = vrot.slane %v417, 1
      %v419 = vadd.f32 %v417, %v418
      %s420 = vtos %v419
      %v421 = vsel %vm400, %v394, 0.0
      %v422 = vsel %vm400, %v395, 0.0
      %v423 = vadd.f32 %v421, %v422
      %v424 = vsel %vm400, %v396, 0.0
      %v425 = vadd.f32 %v423, %v424
      %v426 = vsel %vm400, %v397, 0.0
      %v427 = vadd.f32 %v425, %v426
      %v428 = vsel %vm400, %v398, 0.0
      %v429 = vadd.f32 %v427, %v428
      %v430 = vsel %vm400, %v399, 0.0
      %v431 = vadd.f32 %v429, %v430
      %432 = vadd.xlane.f32.xlu0 %v431
      %v433 = vpop.xlane.xlu0 %432
      %v434 = vrot.slane %v433, 4
      %v435 = vadd.f32 %v433, %v434
      %v436 = vrot.slane %v435, 2
      %v437 = vadd.f32 %v435, %v436
      %v438 = vrot.slane %v437, 1
      %v439 = vadd.f32 %v437, %v438
      %s440 = vtos %v439
      %vm441 = vcmp.eq.s32.totalorder %v357, 0
      %vm442 = vcmp.eq.s32.totalorder %v246, 0
      %vm443 = vmand %vm441, %vm442
      %v444 = vstv %s420
      %v445 = vsel %vm443, %v444, 0.0
      %vm446 = vcmp.eq.s32.totalorder %v246, 1
      %vm447 = vmand %vm441, %vm446
      %v448 = vstv %s440
      %v449 = vsel %vm447, %v448, 0.0
      %v450 = vadd.f32 %v445, %v449
      %451 = vst [vmem:[%s165] sm:$0xff] %v450
      %p452 = scmp.lt.s32.totalorder %s13, 1
      %s453 = scalar_select %p452, %s13, 1
      %s454 = smul.addr %s453, 8
      %s455 = scalar_lea.vmem %s2, %s454
      // Predicated region
      $region29: #{_focal_kl_sums.1} parent=27 // pred_check
        %p456 = pneg %p83
      $region30: #{_focal_kl_sums.1} parent=27 // pred_check_branch
        %458 = sbr.rel (%p456) target = $region32
      $region31: #{_focal_kl_sums.1} parent=27 // pred_region
        _
      $region32: #{_focal_kl_sums.1} parent=27 // pred_fallthru
        _
    $region28: #{_focal_kl_sums.1} parent=5 // pred_fallthru
      _
    %p459 = scmp.le.s32.totalorder 2, %s8
    // Predicated region
    $region33: #{_focal_kl_sums.1} parent=5 // pred_check
      %p460 = pneg %p459
    $region34: #{_focal_kl_sums.1} parent=5 // pred_check_branch
      %462 = sbr.rel (%p460) target = $region36
    $region35: #{_focal_kl_sums.1} parent=5 // pred_region
      %s463 = ssub.s32 %s8, 2
      // Predicated region
      $region37: #{_focal_kl_sums.1} parent=35 // pred_check
        %p464 = pneg %p89
      $region38: #{_focal_kl_sums.1} parent=35 // pred_check_branch
        %466 = sbr.rel (%p464) target = $region40
      $region39: #{_focal_kl_sums.1} parent=35 // pred_region
        %p467 = scmp.lt.s32.totalorder %s14, 1
        %s468 = scalar_select %p467, %s14, 1
        %s469 = smul.addr %s468, 8
        %s470 = scalar_lea.vmem %s2, %s469
      $region40: #{_focal_kl_sums.1} parent=35 // pred_fallthru
        _
    $region36: #{_focal_kl_sums.1} parent=5 // pred_fallthru
      _
  $region6: #{_focal_kl_sums.1} parent=0 // loop_footer
    %s12 = sadd.s32 1, %s8
  $region7: #{_focal_kl_sums.1} parent=0 // loop_footer_branch
    %7 = sbr.rel target = $region3
  $region8: #{_focal_kl_sums.1} parent=0 // loop_exit
    _

</llo_original>
